<compile_context>
chip_gen: v6e
topology: v6e:2x2x1
jax: 0.10.0
libtpu: 0.0.40
codegen_flags: <defaults>
</compile_context>

<pallas_src>
import math
import functools

import jax
import jax.numpy as jnp
from jax import lax
from jax.experimental import pallas as pl
from jax.experimental.pallas import tpu as pltpu


def build_pe_table(seq_len: int, d_model: int) -> jnp.ndarray:
    """Deterministic sin/cos positional encoding table, shape (seq_len, d_model)."""
    assert d_model % 2 == 0, "d_model must be even (same limitation as the PyTorch module)"
    position = jnp.arange(0, seq_len, dtype=jnp.float32)[:, None]            # (S, 1)
    div_term = jnp.exp(
        jnp.arange(0, d_model, 2, dtype=jnp.float32) * (-math.log(10000.0) / d_model)
    )                                                                         # (D/2,)
    angles = position * div_term                                              # (S, D/2)
    pe = jnp.zeros((seq_len, d_model), dtype=jnp.float32)
    pe = pe.at[:, 0::2].set(jnp.sin(angles))
    pe = pe.at[:, 1::2].set(jnp.cos(angles))
    return pe


def _vmem_limit_bytes() -> int:
    """Generation-aware scoped-VMEM limit (v5e/v6e: 128 MiB physical; v7x: 64 MiB)."""
    try:
        cap = int(pltpu.get_tpu_info().vmem_capacity_bytes)
    except Exception:
        cap = 64 * 1024 * 1024  # conservative: assume v7x-sized VMEM
    if cap >= 128 * 1024 * 1024:
        return 64 * 1024 * 1024          # v5e / v6e: ride bigger tiles
    return 48 * 1024 * 1024              # v7x: keep headroom under 64 MiB / TC


def _pe_kernel(x_ref, pe_ref, o_ref, *,
               dropout_p: float, apply_dropout: bool, seed: int,
               bm: int, bn: int, row_stride: int, pe_resident: bool):
    # x_ref: (bm, bn) tile of the flattened (B, SD_pad) input.
    # pe_ref: either the whole (1, SD_pad) row (resident) or a (1, bn) tile.
    if pe_resident:
        col0 = pl.multiple_of(pl.program_id(1) * bn, 128)
        pe_vals = pe_ref[:, pl.ds(col0, bn)]
    else:
        pe_vals = pe_ref[...]

    # Do the add (and dropout math) in f32; cast only at the store.
    y = x_ref[...].astype(jnp.float32) + pe_vals.astype(jnp.float32)

    if apply_dropout:
        # Global element index (unique across tiles): r_global*SD + c_global.
        # Fold the tile origin into one scalar so only one vector int32 mul remains.
        base = pl.program_id(0) * (bm * row_stride) + pl.program_id(1) * bn
        rows = lax.broadcasted_iota(jnp.int32, (bm, bn), 0)
        cols = lax.broadcasted_iota(jnp.int32, (bm, bn), 1)
        idx = lax.bitcast_convert_type(rows * row_stride + cols + base, jnp.uint32)

        seed_mix = jnp.uint32((seed * 0x9E3779B9 + 0x85EBCA6B) & 0xFFFFFFFF)
        # Two-round integer hash (plenty for dropout), all u32 VPU ops.
        h = idx * jnp.uint32(0x9E3779B1) + seed_mix
        h = (h ^ (h >> jnp.uint32(15))) * jnp.uint32(0x2C1B3C6D)
        h = h ^ (h >> jnp.uint32(16))

        # keep iff uniform >= p  <=>  bits >= p * 2^32 (raw u32 threshold compare).
        thresh = jnp.uint32(min(int(round(dropout_p * 4294967296.0)), 4294967295))
        scale = jnp.float32(1.0 / (1.0 - dropout_p))
        y = jnp.where(h >= thresh, y * scale, jnp.float32(0.0))

    o_ref[...] = y.astype(o_ref.dtype)


def positional_encoding(
    x: jnp.ndarray,
    pe: jnp.ndarray,
    *,
    dropout_p: float = 0.1,
    training: bool = False,
    seed: int = 0,
) -> jnp.ndarray:
    """x: (B, S, D); pe: (S_full, D) with S_full >= S.  Matches the PyTorch forward."""
    B, S, D = x.shape
    apply_dropout = bool(training) and float(dropout_p) > 0.0
    if apply_dropout and float(dropout_p) >= 1.0:
        # Everything dropped; avoid infinite 1/(1-p) scale.
        return jnp.zeros_like(x)

    pe_slice = pe[:S, :].astype(jnp.float32)        # matches self.pe[:, :x.shape[1], :]

    # Lane-dense 2D view: rows = batch, lanes = S*D.
    SD = S * D
    x2 = x.reshape(B, SD)
    pe2 = pe_slice.reshape(1, SD)

    # Pad lanes to a multiple of 128 -> unmasked, lane-dense stores on every shape
    # and no VMEM blow-up from a bn=SD fallback.
    SD_pad = -(-SD // 128) * 128
    if SD_pad != SD:
        x2 = jnp.pad(x2, ((0, 0), (0, SD_pad - SD)))
        pe2 = jnp.pad(pe2, ((0, 0), (0, SD_pad - SD)))

    x_bytes = x.dtype.itemsize
    vmem_limit = _vmem_limit_bytes()

    # Keep the pe row fully VMEM-resident when small: fetched once, never re-DMA'd.
    pe_bytes = SD_pad * 4  # pe stays f32
    pe_resident = pe_bytes <= 4 * 1024 * 1024

    # ~65% of the limit for the double-buffered (input + output) blocks.
    budget = int(0.65 * vmem_limit)
    if pe_resident:
        budget -= pe_bytes

    # Tile sizing: start with all rows, then pick the largest 128-multiple bn that
    # keeps 2 buffers x (in + out) x bm x bn x dtype_bytes under the budget.
    bm = B
    if 4 * bm * 128 * x_bytes > budget:
        bm = max(8, (budget // (4 * 128 * x_bytes)) // 8 * 8)
        bm = min(bm, B)
    bn = max(128, (budget // (4 * max(bm, 1) * x_bytes)) // 128 * 128)
    bn = min(SD_pad, bn)

    gi, gj = pl.cdiv(B, bm), pl.cdiv(SD_pad, bn)

    # v7x megacore: make sure at least one parallel axis has >= 2 steps.
    if gi == 1 and gj == 1:
        nb = SD_pad // 128
        if nb >= 2:
            bn = ((nb + 1) // 2) * 128
        elif B >= 16:
            bm = (((B + 1) // 2) + 7) // 8 * 8
        gi, gj = pl.cdiv(B, bm), pl.cdiv(SD_pad, bn)

    kernel = functools.partial(
        _pe_kernel,
        dropout_p=float(dropout_p),
        apply_dropout=apply_dropout,
        seed=int(seed),
        bm=bm,
        bn=bn,
        row_stride=SD_pad,
        pe_resident=pe_resident,
    )

    if pe_resident:
        pe_spec = pl.BlockSpec((1, SD_pad), lambda i, j: (0, 0))   # resident across grid
    else:
        pe_spec = pl.BlockSpec((1, bn), lambda i, j: (0, j))       # tiled fallback

    out2 = pl.pallas_call(
        kernel,
        out_shape=jax.ShapeDtypeStruct((B, SD_pad), x.dtype),
        grid=(gi, gj),
        in_specs=[
            pl.BlockSpec((bm, bn), lambda i, j: (i, j)),   # x tile
            pe_spec,                                       # pe row
        ],
        out_specs=pl.BlockSpec((bm, bn), lambda i, j: (i, j)),
        compiler_params=pltpu.CompilerParams(
            dimension_semantics=("parallel", "parallel"),
            vmem_limit_bytes=vmem_limit,
        ),
    )(x2, pe2)

    if SD_pad != SD:
        out2 = out2[:, :SD]
    return out2.reshape(B, S, D)


if __name__ == "__main__":
    # Module config: d_model=32, seq_len=8, dropout=0.1
    B, S, D = 2, 8, 32
    dropout_p = 0.1

    key = jax.random.PRNGKey(0)
    x = jax.random.normal(key, (B, S, D), dtype=jnp.float32)

    pe = build_pe_table(S, D)

    # Eval-mode forward (dropout is identity): deterministic and checkable.
    out = positional_encoding(x, pe, dropout_p=dropout_p, training=False)
    out = jax.block_until_ready(out)

    ref = x + pe[None, :, :]
    assert out.shape == (B, S, D)
    assert jnp.allclose(out, ref, atol=1e-6), "eval-mode mismatch vs reference"

    # Training-mode forward: every element is either dropped (0) or kept & scaled.
    out_train = positional_encoding(x, pe, dropout_p=dropout_p, training=True, seed=42)
    out_train = jax.block_until_ready(out_train)
    assert out_train.shape == (B, S, D)
    assert bool(jnp.all(jnp.isfinite(out_train)))
    scaled_ref = ref / (1.0 - dropout_p)
    is_dropped = out_train == 0.0
    is_kept = jnp.abs(out_train - scaled_ref) < 1e-5
    assert bool(jnp.all(is_dropped | is_kept)), "training-mode values are neither dropped nor scaled-kept"
    keep_frac = float(jnp.mean(is_kept.astype(jnp.float32)))
    assert 0.70 <= keep_frac <= 1.0, f"implausible keep fraction {keep_frac}"

    print("KERNEL_OK")
</pallas_src>

<mosaic_0001>
module attributes {stable_mosaic.version = 11 : i64} {
  func.func @_pe_kernel(%arg0: i32, %arg1: i32, %arg2: memref<2x128xf32, #tpu.memory_space<vmem>>, %arg3: memref<1x256xf32, #tpu.memory_space<vmem>>, %arg4: memref<2x128xf32, #tpu.memory_space<vmem>>) attributes {dimension_semantics = [#tpu.dimension_semantics<parallel>, #tpu.dimension_semantics<parallel>], iteration_bounds = array<i64: 1, 2>, scalar_prefetch = 0 : i64, scratch_operands = 0 : i64, tpu.core_type = #tpu.core_type<tc>, window_params = [{transform_indices = @transform_0, window_bounds = array<i64: 2, 128>}, {pipeline_mode = #tpu.pipeline_mode<synchronous>, transform_indices = @transform_1, window_bounds = array<i64: 1, 256>}, {transform_indices = @transform_2, window_bounds = array<i64: 2, 128>}]} {
    %c128_i32 = arith.constant 128 : i32
    %0 = arith.muli %arg1, %c128_i32 : i32
    %1 = tpu.assume_multiple %0, 128 : i32
    %c0 = arith.constant 0 : index
    %2 = arith.index_cast %1 : i32 to index
    %3 = vector.load %arg3[%c0, %2] : memref<1x256xf32, #tpu.memory_space<vmem>>, vector<1x128xf32>
    %c0_0 = arith.constant 0 : index
    %c0_1 = arith.constant 0 : index
    %4 = vector.load %arg2[%c0_0, %c0_1] : memref<2x128xf32, #tpu.memory_space<vmem>>, vector<2x128xf32>
    %5 = vector.broadcast %3 : vector<1x128xf32> to vector<2x128xf32>
    %6 = arith.addf %4, %5 : vector<2x128xf32>
    %c0_2 = arith.constant 0 : index
    %c0_3 = arith.constant 0 : index
    %7 = vector.load %arg4[%c0_2, %c0_3] : memref<2x128xf32, #tpu.memory_space<vmem>>, vector<2x128xf32>
    tpu.vector_store %arg4[%c0_2, %c0_3], %6 {strides = array<i32>} : memref<2x128xf32, #tpu.memory_space<vmem>>, vector<2x128xf32>,
    return
  }
  func.func @transform_0(%arg0: i32, %arg1: i32) -> (i32, i32) {
    %c0_i32 = arith.constant 0 : i32
    return %arg0, %arg1 : i32, i32
  }
  func.func @transform_1(%arg0: i32, %arg1: i32) -> (i32, i32) {
    %c0_i32 = arith.constant 0 : i32
    %c0_i32_0 = arith.constant 0 : i32
    %c0_i32_1 = arith.constant 0 : i32
    return %c0_i32, %c0_i32_0 : i32, i32
  }
  func.func @transform_2(%arg0: i32, %arg1: i32) -> (i32, i32) {
    %c0_i32 = arith.constant 0 : i32
    return %arg0, %arg1 : i32, i32
  }
}

</mosaic_0001>

<llo_original>
// kernel: tpu_custom_call.1
$region0: #{tpu_custom_call.1}
  #allocation0 [shape = 'u32[]', space=smem, size = 0x4, offset = 0x4, fixed_abs, tag = 'smem constant byte address 0x4 - core index']
  #allocation1 [shape = 'u32[144,128]{1,0:T(1,128)}', space=vmem, size = 0x12000, scoped, tag = 'internal scratch']
  %s0 = inlined_call_operand.hbm [shape: f32[2,256], index: 0, kind: input, shape index: {}]
  %s1 = inlined_call_operand.hbm [shape: f32[1,256], index: 1, kind: input, shape index: {}]
  %s2 = inlined_call_operand.hbm [shape: f32[2,256], index: 2, kind: output, shape index: {}]
  %s3 = sld [smem:[#allocation0]]
  $region49: #{tpu_custom_call.1} parent=0
    _
  %s5 = ssub.s32 1, %s3
  %s6 = scalar_select 0, %s5, %s3
  $region1: #{tpu_custom_call.1} parent=0
    #allocation2 [shape = 'u8[2048]{0}', space=vmem, size = 0x800, scoped, tag = 'input window, operand 0']
    #allocation3 [shape = 's32[2]{0}', space=sflag, size = 0x8, scoped, tag = 'scoped memory for tpu_custom_call.1']
    #allocation4 [shape = 's32[2]{0}', space=sflag, size = 0x8, scoped, tag = 'scoped memory for tpu_custom_call.1']
    #allocation5 [shape = 'u8[1024]{0}', space=vmem, size = 0x400, scoped, tag = 'input window, operand 1, single buffered']
    #allocation6 [shape = 's32[1]{0}', space=sflag, size = 0x4, scoped, tag = 'scoped memory for tpu_custom_call.1']
    #allocation7 [shape = 'u8[2048]{0}', space=vmem, size = 0x800, scoped, tag = 'output window, operand 0']
    %7 = vsyncpa [#allocation3], 0
    %s8 = scalar_lea.sflag [#allocation3], 1
    %9 = vsyncpa %s8, 0
    %10 = vsyncpa [#allocation6], 0
    %11 = vsyncpa [#allocation4], 0
    %s12 = scalar_lea.sflag [#allocation4], 1
    %13 = vsyncpa %s12, 0
    loop: start=0, step=1, limit=4
    $region2: #{tpu_custom_call.1} parent=1 // loop_pre_header
      _
    $region3: #{tpu_custom_call.1} parent=1 // loop_header
      %s15 = sphi 0, %s19
      %p16 = scmp.ge.s32.totalorder %s15, 4
      %s22 = sphi 0, %s34
      %s23 = sphi 0, %s30
      %s24 = sphi 0, %s22
      %s25 = sphi 0, %s23
      %s26 = sphi 0, %s24
      %s27 = sphi 0, %s25
      %s39 = sphi 0, %s41
      %s42 = sphi 0, %s39
      %s43 = sphi 0, %s42
      %s59 = sphi 0, %s43
      %s63 = sphi 0, %s63
      %s65 = sphi 0, %s63
      %s66 = sphi 0, %s65
      %s80 = sphi 0, %s66
      %s88 = sphi 0, %s90
      %s91 = sphi 0, %s88
      %s92 = sphi 0, %s91
      %s108 = sphi 0, %s92
    $region4: #{tpu_custom_call.1} parent=1 // loop_header_branch
      %18 = sbr.rel (%p16) target = $region8
    $region5: #{tpu_custom_call.1} parent=1 // loop_body
      %s20 = ssub.s32 %s15, 1
      %s21 = ssub.s32 %s15, 2
      %s28 = sadd.s32 1, %s23
      %p29 = scmp.ge.s32.totalorder %s28, 2
      %s30 = scalar_select %p29, 0, %s28
      %s31 = sadd.s32 1, %s22
      %s32 = scalar_select %p29, %s31, %s22
      %p33 = scmp.ge.s32.totalorder %s32, 1
      %s34 = scalar_select %p33, 0, %s32
      %s35 = ssub.s32 %s22, %s34
      %s36 = ssub.s32 %s23, %s30
      %s37 = sor.u32 %s35, %s36
      %p38 = scmp.eq.s32.totalorder %s37, 0
      %s40 = sadd.s32 %s39, 1
      %s41 = scalar_select %p38, %s39, %s40
      %p44 = pneg %p38
      %p45 = scmp.eq.s32.totalorder %s15, 1
      %p46 = por %p44, %p45
      %p47 = scmp.ne.s32.totalorder %s39, %s42
      %p48 = scmp.eq.s32.totalorder %s15, 0
      %p49 = por %p47, %p48
      %p50 = scmp.ne.s32.totalorder %s39, %s42
      %p51 = scmp.eq.s32.totalorder %s20, 1
      %p52 = por %p50, %p51
      %p53 = scmp.ne.s32.totalorder %s42, %s43
      %p54 = scmp.eq.s32.totalorder %s20, 0
      %p55 = por %p53, %p54
      %p56 = scmp.ne.s32.totalorder %s42, %s43
      %p57 = scmp.eq.s32.totalorder %s21, 1
      %p58 = por %p56, %p57
      %p60 = scmp.ne.s32.totalorder %s43, %s59
      %p61 = scmp.eq.s32.totalorder %s21, 0
      %p62 = por %p60, %p61
      %s64 = sadd.s32 %s63, 1
      %p67 = scmp.eq.s32.totalorder %s15, 1
      %p68 = scmp.ne.s32.totalorder %s63, %s65
      %p69 = scmp.eq.s32.totalorder %s15, 0
      %p70 = por %p68, %p69
      %p71 = scmp.ne.s32.totalorder %s63, %s65
      %p72 = scmp.eq.s32.totalorder %s20, 1
      %p73 = por %p71, %p72
      %p74 = scmp.ne.s32.totalorder %s65, %s66
      %p75 = scmp.eq.s32.totalorder %s20, 0
      %p76 = por %p74, %p75
      %p77 = scmp.ne.s32.totalorder %s65, %s66
      %p78 = scmp.eq.s32.totalorder %s21, 1
      %p79 = por %p77, %p78
      %p81 = scmp.ne.s32.totalorder %s66, %s80
      %p82 = scmp.eq.s32.totalorder %s21, 0
      %p83 = por %p81, %p82
      %s84 = ssub.s32 %s22, %s34
      %s85 = ssub.s32 %s23, %s30
      %s86 = sor.u32 %s84, %s85
      %p87 = scmp.eq.s32.totalorder %s86, 0
      %s89 = sadd.s32 %s88, 1
      %s90 = scalar_select %p87, %s88, %s89
      %p93 = pneg %p87
      %p94 = scmp.eq.s32.totalorder %s15, 1
      %p95 = por %p93, %p94
      %p96 = scmp.ne.s32.totalorder %s88, %s91
      %p97 = scmp.eq.s32.totalorder %s15, 0
      %p98 = por %p96, %p97
      %p99 = scmp.ne.s32.totalorder %s88, %s91
      %p100 = scmp.eq.s32.totalorder %s20, 1
      %p101 = por %p99, %p100
      %p102 = scmp.ne.s32.totalorder %s91, %s92
      %p103 = scmp.eq.s32.totalorder %s20, 0
      %p104 = por %p102, %p103
      %p105 = scmp.ne.s32.totalorder %s91, %s92
      %p106 = scmp.eq.s32.totalorder %s21, 1
      %p107 = por %p105, %p106
      %p109 = scmp.ne.s32.totalorder %s92, %s108
      %p110 = scmp.eq.s32.totalorder %s21, 0
      %p111 = por %p109, %p110
      %p112 = scmp.le.s32.totalorder 1, %s15
      %p113 = scmp.lt.s32.totalorder %s15, 3
      %p114 = pnand %p112, %p113
      %p115 = pneg %p114
      // Predicated region
      $region9: #{tpu_custom_call.1} parent=5 // pred_check
        _
      $region10: #{tpu_custom_call.1} parent=5 // pred_check_branch
        %117 = sbr.rel (%p114) target = $region12
      $region11: #{tpu_custom_call.1} parent=5 // pred_region
        %s118 = ssub.s32 %s15, 1
        // Predicated region
        $region13: #{tpu_custom_call.1} parent=11 // pred_check
          %p119 = pneg %p76
        $region14: #{tpu_custom_call.1} parent=11 // pred_check_branch
          %121 = sbr.rel (%p119) target = $region16
        $region15: #{tpu_custom_call.1} parent=11 // pred_region
          %s123 = ssub.s32 32, 32
          %124 = vsyncadd [#allocation6], %s123
          %s126 = sshll.u32 [#allocation5], 4
          %s127 = int_to_ptr.vmem [resolvable:$true] %s126
          %129 = dma.hbm_to_vmem [thread:$0]  %s1, 32, %s127, [#allocation6]
        $region16: #{tpu_custom_call.1} parent=11 // pred_fallthru
          _
      $region12: #{tpu_custom_call.1} parent=5 // pred_fallthru
        _
      %p130 = scmp.lt.s32.totalorder %s15, 2
      // Predicated region
      $region17: #{tpu_custom_call.1} parent=5 // pred_check
        %p131 = pneg %p130
      $region18: #{tpu_custom_call.1} parent=5 // pred_check_branch
        %133 = sbr.rel (%p131) target = $region20
      $region19: #{tpu_custom_call.1} parent=5 // pred_region
        // Predicated region
        $region21: #{tpu_custom_call.1} parent=19 // pred_check
          %p134 = pneg %p49
        $region22: #{tpu_custom_call.1} parent=19 // pred_check_branch
          %136 = sbr.rel (%p134) target = $region24
        $region23: #{tpu_custom_call.1} parent=19 // pred_region
          %s137 = sand.u32 %s39, 1
          %s138 = scalar_lea.sflag [#allocation3], %s137
          %s139 = sand.u32 %s39, 1
          %s140 = smul.addr %s139, 2
          %s141 = scalar_lea.vmem [#allocation2], %s140
          %s143 = ssub.s32 32, 32
          %144 = vsyncadd %s138, %s143
          %s145 = smul.addr %s22, 2
          %s146 = sadd.s32 %s23, %s145
          %s147 = smul.addr %s146, 32
          %s148 = scalar_lea.hbm %s0, %s147
          %s150 = sshll.u32 %s141, 4
          %s151 = int_to_ptr.vmem [resolvable:$true] %s150
          %153 = dma.hbm_to_vmem [thread:$0]  %s148, 32, %s151, %s138
        $region24: #{tpu_custom_call.1} parent=19 // pred_fallthru
          _
      $region20: #{tpu_custom_call.1} parent=5 // pred_fallthru
        _
      %p154 = scmp.le.s32.totalorder 1, %s15
      %p155 = scmp.lt.s32.totalorder %s15, 3
      %p156 = pnand %p154, %p155
      %p157 = pneg %p156
      // Predicated region
      $region25: #{tpu_custom_call.1} parent=5 // pred_check
        _
      $region26: #{tpu_custom_call.1} parent=5 // pred_check_branch
        %159 = sbr.rel (%p156) target = $region28
      $region27: #{tpu_custom_call.1} parent=5 // pred_region
        %s160 = ssub.s32 %s15, 1
        %s161 = sand.u32 %s42, 1
        %s162 = scalar_lea.sflag [#allocation3], %s161
        %s163 = sand.u32 %s42, 1
        %s164 = smul.addr %s163, 2
        %s165 = scalar_lea.vmem [#allocation2], %s164
        // Predicated region
        $region29: #{tpu_custom_call.1} parent=27 // pred_check
          %p166 = pneg %p55
        $region30: #{tpu_custom_call.1} parent=27 // pred_check_branch
          %168 = sbr.rel (%p166) target = $region32
        $region31: #{tpu_custom_call.1} parent=27 // pred_region
          %169 = dma.done %s162, 32
        $region32: #{tpu_custom_call.1} parent=27 // pred_fallthru
          _
        // Predicated region
        $region33: #{tpu_custom_call.1} parent=27 // pred_check
          %p170 = pneg %p76
        $region34: #{tpu_custom_call.1} parent=27 // pred_check_branch
          %172 = sbr.rel (%p170) target = $region36
        $region35: #{tpu_custom_call.1} parent=27 // pred_region
          %173 = dma.done [#allocation6], 32
        $region36: #{tpu_custom_call.1} parent=27 // pred_fallthru
          _
        %s174 = sand.u32 %s42, 1
        %s175 = scalar_lea.sflag [#allocation3], %s174
        %s176 = sand.u32 %s42, 1
        %s177 = smul.addr %s176, 2
        %s178 = scalar_lea.vmem [#allocation2], %s177
        %p179 = pneg %p55
        %p180 = pneg %p52
        %p181 = pneg %p76
        %p182 = pneg %p73
        %p183 = pneg %p104
        %p184 = pneg %p101
        %s185 = sand.u32 %s91, 1
        %s186 = scalar_lea.sflag [#allocation4], %s185
        %s187 = sand.u32 %s91, 1
        %s188 = smul.addr %s187, 2
        %s189 = scalar_lea.vmem [#allocation7], %s188
        %s190 = smul.u32 %s25, 128
        %s191 = sshra.s32 %s190, 7
        %s192 = sand.u32 %s190, 127
        %s193 = scalar_lea.vmem [#allocation5], %s191
        %v194 = vld [vmem:[%s193] sm:$0x1]
        %v195 = vld [vmem:[%s165] sm:$0x3]
        %v197 = vlaneseq
        %v198 = vshrl.u32 %v197, 7
        %v199 = vsub.s32 0, %v198
        %v200 = vrot.slane %v194, %v199
        %v202 = vadd.f32 %v195, %v200
        %203 = vst [vmem:[%s189] sm:$0x3] %v202
        %s204 = sand.u32 %s91, 1
        %s205 = scalar_lea.sflag [#allocation4], %s204
        %s206 = sand.u32 %s91, 1
        %s207 = smul.addr %s206, 2
        %s208 = scalar_lea.vmem [#allocation7], %s207
        // Predicated region
        $region37: #{tpu_custom_call.1} parent=27 // pred_check
          %p209 = pneg %p101
        $region38: #{tpu_custom_call.1} parent=27 // pred_check_branch
          %211 = sbr.rel (%p209) target = $region40
        $region39: #{tpu_custom_call.1} parent=27 // pred_region
          %s213 = ssub.s32 32, 32
          %214 = vsyncadd %s205, %s213
          %s215 = smul.addr %s24, 2
          %s216 = sadd.s32 %s25, %s215
          %s217 = smul.addr %s216, 32
          %s218 = scalar_lea.hbm %s2, %s217
          %s220 = sshll.u32 %s208, 4
          %s221 = int_to_ptr.vmem [resolvable:$true] %s220
          %223 = dma.vmem_to_hbm [thread:$0]  %s221, 32, %s218, %s205
        $region40: #{tpu_custom_call.1} parent=27 // pred_fallthru
          _
      $region28: #{tpu_custom_call.1} parent=5 // pred_fallthru
        _
      %p224 = scmp.le.s32.totalorder 2, %s15
      // Predicated region
      $region41: #{tpu_custom_call.1} parent=5 // pred_check
        %p225 = pneg %p224
      $region42: #{tpu_custom_call.1} parent=5 // pred_check_branch
        %227 = sbr.rel (%p225) target = $region44
      $region43: #{tpu_custom_call.1} parent=5 // pred_region
        %s228 = ssub.s32 %s15, 2
        // Predicated region
        $region45: #{tpu_custom_call.1} parent=43 // pred_check
          %p229 = pneg %p107
        $region46: #{tpu_custom_call.1} parent=43 // pred_check_branch
          %231 = sbr.rel (%p229) target = $region48
        $region47: #{tpu_custom_call.1} parent=43 // pred_region
          %s232 = sand.u32 %s92, 1
          %s233 = scalar_lea.sflag [#allocation4], %s232
          %s234 = sand.u32 %s92, 1
          %s235 = smul.addr %s234, 2
          %s236 = scalar_lea.vmem [#allocation7], %s235
          %237 = dma.done %s233, 32
        $region48: #{tpu_custom_call.1} parent=43 // pred_fallthru
          _
      $region44: #{tpu_custom_call.1} parent=5 // pred_fallthru
        _
    $region6: #{tpu_custom_call.1} parent=1 // loop_footer
      %s19 = sadd.s32 1, %s15
    $region7: #{tpu_custom_call.1} parent=1 // loop_footer_branch
      %14 = sbr.rel target = $region3
    $region8: #{tpu_custom_call.1} parent=1 // loop_exit
      _
    %238 = vsyncpa [#allocation3], 1
    %s239 = scalar_lea.sflag [#allocation3], 1
    %240 = vsyncpa %s239, 1
    %241 = vsyncpa [#allocation6], 1
    %242 = vsyncpa [#allocation4], 1
    %s243 = scalar_lea.sflag [#allocation4], 1
    %244 = vsyncpa %s243, 1

</llo_original>
